<compile_context>
chip_gen: v5e
topology: v5e:2x2
jax: 0.10.0
libtpu: 0.0.40
codegen_flags: <defaults>
</compile_context>

<pallas_src>
import jax
import jax.numpy as jnp
from jax import lax
from jax.experimental import pallas as pl
from jax.experimental.pallas import tpu as pltpu


# ---------------------------------------------------------------------------
# Kernel 1: table kernel, gridded over S.
#   params_ref : SMEM (3,)   [offset, interpolate_factor, scale]
#   fb_ref     : (1, D)      base freqs, interleaved-repeated (f0,f0,f1,f1,...)
#   freqs_ref  : (ts, D)     module.forward() output tile
#   cos_ref    : (ts, D)     cos(freqs) * scale
#   sin_ref    : (ts, D)     signed sin: -sin*scale on even lanes, +sin*scale on odd
# ---------------------------------------------------------------------------
def _tables_kernel(params_ref, fb_ref, freqs_ref, cos_ref, sin_ref):
    offset = params_ref[0]
    interp = params_ref[1]
    scale = params_ref[2]

    ts, D = freqs_ref.shape
    row0 = pl.program_id(0) * ts
    # get_seq_pos: (arange(S) + offset) / interpolate_factor
    pos = (row0 + lax.broadcasted_iota(jnp.int32, (ts, D), 0)).astype(jnp.float32)
    pos = (pos + offset) / interp
    phase = pos * fb_ref[...]                      # (ts, D) via (1, D) broadcast
    freqs_ref[...] = phase

    c = jnp.cos(phase) * scale
    s = jnp.sin(phase) * scale
    parity = lax.broadcasted_iota(jnp.int32, (ts, D), 1) % 2
    cos_ref[...] = c
    # rotate_half pairs: out[2k] += -x[2k+1]*sin, out[2k+1] += +x[2k]*sin
    sin_ref[...] = jnp.where(parity == 0, -s, s)


# ---------------------------------------------------------------------------
# Kernel 2: rotation kernel on (tb, ts, D) blocks; rolls are along D (axis 2),
# so wrap-around never matters: even lanes select the j+1 neighbor (valid),
# odd lanes select the j-1 neighbor (valid). Sign lives in the sin table.
# ---------------------------------------------------------------------------
def _rotate_kernel(x_ref, cos_ref, sin_ref, o_ref):
    x = x_ref[...].astype(jnp.float32)             # (tb, ts, D)
    D = x.shape[-1]
    nxt = pltpu.roll(x, shift=D - 1, axis=2)       # nxt[..., j] = x[..., (j+1) % D]
    prv = pltpu.roll(x, shift=1, axis=2)           # prv[..., j] = x[..., (j-1) % D]
    parity = lax.broadcasted_iota(jnp.int32, x.shape, 2) % 2
    rot = jnp.where(parity == 0, nxt, prv)         # pair partner of lane j
    out = x * cos_ref[...] + rot * sin_ref[...]    # (ts,D) broadcasts over tb
    o_ref[...] = out.astype(o_ref.dtype)


def _choose_tiles(BH, S, D, *, block_budget_bytes=1 << 20, min_steps=4):
    """Pick (tb, ts).

    ts: sequence tile — full S for small S, otherwise 512 (multiple of 8).
    tb: rows per block along B*H, sized off the f32 temporary footprint
        (the real per-step VMEM cost is ~4-5x the f32 block plus double-
        buffered IO, so the budget refers to tb*ts*D*4 bytes).
    Guarantees >= min_steps total grid steps when the problem allows, so the
    BlockSpec double-buffer pipeline and both v7x TensorCores engage.
    """
    ts = S if S <= 512 else 512
    row_f32 = ts * D * 4
    tb = max(1, min(BH, block_budget_bytes // max(row_f32, 1)))

    def steps(tb_):
        return pl.cdiv(BH, tb_) * pl.cdiv(S, ts)

    while tb > 1 and steps(tb) < min_steps:
        tb = max(1, tb // 2)
    return tb, ts


def rotary_embedding_forward(x, freqs_base, *, offset=0, interpolate_factor=1.0,
                             scale=1.0):
    """Returns (freqs, rotated_x).

    freqs     : (S, D)       == RotaryEmbedding.forward(get_seq_pos(S))
    rotated_x : (B, H, S, D) == RotaryEmbedding.rotate_queries_or_keys(x)
    """
    B, H, S, D = x.shape
    assert D % 2 == 0 and freqs_base.shape == (D // 2,)
    BH = B * H
    itemsize = jnp.dtype(x.dtype).itemsize

    tb, ts = _choose_tiles(BH, S, D)

    # Tiny host-side prep: interleaved repeat of base freqs + SMEM scalars.
    fb_rep = jnp.repeat(freqs_base.astype(jnp.float32), 2).reshape(1, D)
    params = jnp.asarray([offset, interpolate_factor, scale], dtype=jnp.float32)

    # --- table kernel: freqs / cos / signed-sin computed exactly once -------
    n_s = pl.cdiv(S, ts)
    freqs, cos_t, sin_t = pl.pallas_call(
        _tables_kernel,
        grid=(n_s,),
        in_specs=[
            pl.BlockSpec(memory_space=pltpu.MemorySpace.SMEM),
            pl.BlockSpec((1, D), lambda s: (0, 0)),
        ],
        out_specs=[pl.BlockSpec((ts, D), lambda s: (s, 0))] * 3,
        out_shape=[jax.ShapeDtypeStruct((S, D), jnp.float32)] * 3,
        compiler_params=pltpu.CompilerParams(
            dimension_semantics=("arbitrary",),
        ),
    )(params, fb_rep)

    # --- rotation kernel: 3-D blocks, no (S,D)->(S*D) relayout --------------
    x3 = x.reshape(BH, S, D)   # merges leading dims only: layout-free

    blk_io = tb * ts * D * itemsize
    blk_f32 = tb * ts * D * 4
    tab_bytes = ts * D * 4
    # 2x in + 2x out double-buffered blocks + ~5 live f32 temps + 2 tables x2 bufs
    est = 4 * blk_io + 5 * blk_f32 + 4 * tab_bytes
    vmem_limit = int(min(48 << 20, max(16 << 20, 2 * est)))

    grid = (pl.cdiv(BH, tb), n_s)
    out3 = pl.pallas_call(
        _rotate_kernel,
        grid=grid,
        in_specs=[
            pl.BlockSpec((tb, ts, D), lambda i, s: (i, s, 0)),
            pl.BlockSpec((ts, D), lambda i, s: (s, 0)),
            pl.BlockSpec((ts, D), lambda i, s: (s, 0)),
        ],
        out_specs=pl.BlockSpec((tb, ts, D), lambda i, s: (i, s, 0)),
        out_shape=jax.ShapeDtypeStruct((BH, S, D), x.dtype),
        compiler_params=pltpu.CompilerParams(
            dimension_semantics=("parallel", "parallel"),
            vmem_limit_bytes=vmem_limit,
        ),
    )(x3, cos_t, sin_t)

    return freqs, out3.reshape(B, H, S, D)


def _reference(x, freqs_base, offset=0, interpolate_factor=1.0, scale=1.0):
    """Pure-JAX mirror of the PyTorch module (forward + apply_rotary_emb)."""
    B, H, S, D = x.shape
    pos = (jnp.arange(S, dtype=jnp.float32) + offset) / interpolate_factor
    fr = pos[:, None] * freqs_base[None, :]          # (S, D//2)
    fr = jnp.repeat(fr, 2, axis=-1)                  # (S, D) interleaved repeat
    cos, sin = jnp.cos(fr), jnp.sin(fr)
    xr = x.reshape(B, H, S, D // 2, 2)
    x1, x2 = xr[..., 0], xr[..., 1]
    rot = jnp.stack([-x2, x1], axis=-1).reshape(B, H, S, D)      # rotate_half
    out = x * cos * scale + rot * sin * scale
    return fr, out.astype(x.dtype)


if __name__ == "__main__":
    # module config (freqs_for='lang'): deterministic parameter init from __init__
    dim = 32
    theta = 10000.0
    freqs_base = 1.0 / theta ** (
        jnp.arange(0, dim, 2, dtype=jnp.float32)[: dim // 2] / dim)

    B, H, S, D = 2, 4, 16, dim
    key = jax.random.PRNGKey(0)
    x = jax.random.normal(key, (B, H, S, D), dtype=jnp.float32)

    freqs, rotated = rotary_embedding_forward(x, freqs_base)
    jax.block_until_ready(freqs)
    jax.block_until_ready(rotated)

    freqs_ref, rotated_ref = _reference(x, freqs_base)
    assert jnp.allclose(freqs, freqs_ref, atol=1e-5, rtol=1e-5)
    assert jnp.allclose(rotated, rotated_ref, atol=1e-5, rtol=1e-5)

    print("KERNEL_OK")
</pallas_src>

<mosaic_0001>
module attributes {stable_mosaic.version = 11 : i64} {
  func.func @_tables_kernel(%arg0: i32, %arg1: memref<3xf32, #tpu.memory_space<smem>>, %arg2: memref<1x32xf32, #tpu.memory_space<vmem>>, %arg3: memref<16x32xf32, #tpu.memory_space<vmem>>, %arg4: memref<16x32xf32, #tpu.memory_space<vmem>>, %arg5: memref<16x32xf32, #tpu.memory_space<vmem>>) attributes {dimension_semantics = [#tpu.dimension_semantics<arbitrary>], iteration_bounds = array<i64: 1>, scalar_prefetch = 0 : i64, scratch_operands = 0 : i64, tpu.core_type = #tpu.core_type<tc>, window_params = [{transform_indices = @transform_0, window_bounds = array<i64: 3>}, {pipeline_mode = #tpu.pipeline_mode<synchronous>, transform_indices = @transform_1, window_bounds = array<i64: 1, 32>}, {transform_indices = @transform_2, window_bounds = array<i64: 16, 32>}, {transform_indices = @transform_3, window_bounds = array<i64: 16, 32>}, {transform_indices = @transform_4, window_bounds = array<i64: 16, 32>}]} {
    %c0 = arith.constant 0 : index
    %0 = memref.load %arg1[%c0] : memref<3xf32, #tpu.memory_space<smem>>
    %c1 = arith.constant 1 : index
    %1 = memref.load %arg1[%c1] : memref<3xf32, #tpu.memory_space<smem>>
    %c2 = arith.constant 2 : index
    %2 = memref.load %arg1[%c2] : memref<3xf32, #tpu.memory_space<smem>>
    %c16_i32 = arith.constant 16 : i32
    %3 = arith.muli %arg0, %c16_i32 : i32
    %4 = tpu.iota {dimensions = array<i32: 0>} : vector<16x32xi32>
    %5 = vector.broadcast %3 : i32 to vector<16x32xi32>
    %6 = arith.addi %5, %4 : vector<16x32xi32>
    %7 = arith.sitofp %6 : vector<16x32xi32> to vector<16x32xf32>
    %8 = vector.broadcast %0 : f32 to vector<16x32xf32>
    %9 = arith.addf %7, %8 : vector<16x32xf32>
    %10 = vector.broadcast %1 : f32 to vector<16x32xf32>
    %11 = arith.divf %9, %10 : vector<16x32xf32>
    %c0_0 = arith.constant 0 : index
    %c0_1 = arith.constant 0 : index
    %12 = vector.load %arg2[%c0_0, %c0_1] : memref<1x32xf32, #tpu.memory_space<vmem>>, vector<1x32xf32>
    %13 = vector.broadcast %12 : vector<1x32xf32> to vector<16x32xf32>
    %14 = arith.mulf %11, %13 : vector<16x32xf32>
    %c0_2 = arith.constant 0 : index
    %c0_3 = arith.constant 0 : index
    %15 = vector.load %arg3[%c0_2, %c0_3] : memref<16x32xf32, #tpu.memory_space<vmem>>, vector<16x32xf32>
    tpu.vector_store %arg3[%c0_2, %c0_3], %14 {strides = array<i32>} : memref<16x32xf32, #tpu.memory_space<vmem>>, vector<16x32xf32>,
    %16 = math.cos %14 : vector<16x32xf32>
    %17 = vector.broadcast %2 : f32 to vector<16x32xf32>
    %18 = arith.mulf %16, %17 : vector<16x32xf32>
    %19 = math.sin %14 : vector<16x32xf32>
    %20 = vector.broadcast %2 : f32 to vector<16x32xf32>
    %21 = arith.mulf %19, %20 : vector<16x32xf32>
    %22 = tpu.iota {dimensions = array<i32: 1>} : vector<16x32xi32>
    %c2_i32 = arith.constant 2 : i32
    %c0_i32 = arith.constant 0 : i32
    %23 = arith.cmpi eq, %c2_i32, %c0_i32 : i32
    %c1_i32 = arith.constant 1 : i32
    %24 = arith.select %23, %c1_i32, %c2_i32 : i32
    %25 = vector.broadcast %24 : i32 to vector<16x32xi32>
    %26 = arith.remsi %22, %25 : vector<16x32xi32>
    %c0_i32_4 = arith.constant 0 : i32
    %27 = vector.broadcast %c0_i32_4 : i32 to vector<16x32xi32>
    %28 = arith.cmpi ne, %26, %27 : vector<16x32xi32>
    %c0_i32_5 = arith.constant 0 : i32
    %29 = vector.broadcast %c0_i32_5 : i32 to vector<16x32xi32>
    %30 = arith.cmpi slt, %26, %29 : vector<16x32xi32>
    %c0_i32_6 = arith.constant 0 : i32
    %31 = arith.cmpi slt, %24, %c0_i32_6 : i32
    %32 = vector.broadcast %31 : i1 to vector<16x32xi1>
    %33 = vector.broadcast %32 : vector<16x32xi1> to vector<16x32xi1>
    %34 = arith.xori %30, %33 : vector<16x32xi1>
    %35 = arith.andi %34, %28 : vector<16x32xi1>
    %36 = vector.broadcast %24 : i32 to vector<16x32xi32>
    %37 = arith.addi %26, %36 : vector<16x32xi32>
    %38 = arith.select %35, %37, %26 : vector<16x32xi1>, vector<16x32xi32>
    %c0_7 = arith.constant 0 : index
    %c0_8 = arith.constant 0 : index
    %39 = vector.load %arg4[%c0_7, %c0_8] : memref<16x32xf32, #tpu.memory_space<vmem>>, vector<16x32xf32>
    tpu.vector_store %arg4[%c0_7, %c0_8], %18 {strides = array<i32>} : memref<16x32xf32, #tpu.memory_space<vmem>>, vector<16x32xf32>,
    %c0_i32_9 = arith.constant 0 : i32
    %40 = vector.broadcast %c0_i32_9 : i32 to vector<16x32xi32>
    %41 = arith.cmpi eq, %38, %40 : vector<16x32xi32>
    %cst = arith.constant 0.000000e+00 : f32
    %42 = vector.broadcast %cst : f32 to vector<16x32xf32>
    %43 = arith.subf %42, %21 : vector<16x32xf32>
    %44 = arith.select %41, %43, %21 : vector<16x32xi1>, vector<16x32xf32>
    %c0_10 = arith.constant 0 : index
    %c0_11 = arith.constant 0 : index
    %45 = vector.load %arg5[%c0_10, %c0_11] : memref<16x32xf32, #tpu.memory_space<vmem>>, vector<16x32xf32>
    tpu.vector_store %arg5[%c0_10, %c0_11], %44 {strides = array<i32>} : memref<16x32xf32, #tpu.memory_space<vmem>>, vector<16x32xf32>,
    return
  }
  func.func @transform_0(%arg0: i32) -> i32 {
    %c0_i32 = arith.constant 0 : i32
    %c0_i32_0 = arith.constant 0 : i32
    return %c0_i32 : i32
  }
  func.func @transform_1(%arg0: i32) -> (i32, i32) {
    %c0_i32 = arith.constant 0 : i32
    %c0_i32_0 = arith.constant 0 : i32
    %c0_i32_1 = arith.constant 0 : i32
    return %c0_i32, %c0_i32_0 : i32, i32
  }
  func.func @transform_2(%arg0: i32) -> (i32, i32) {
    %c0_i32 = arith.constant 0 : i32
    %c0_i32_0 = arith.constant 0 : i32
    return %arg0, %c0_i32 : i32, i32
  }
  func.func @transform_3(%arg0: i32) -> (i32, i32) {
    %c0_i32 = arith.constant 0 : i32
    %c0_i32_0 = arith.constant 0 : i32
    return %arg0, %c0_i32 : i32, i32
  }
  func.func @transform_4(%arg0: i32) -> (i32, i32) {
    %c0_i32 = arith.constant 0 : i32
    %c0_i32_0 = arith.constant 0 : i32
    return %arg0, %c0_i32 : i32, i32
  }
}

</mosaic_0001>

<llo_original>
// kernel: tpu_custom_call.1
$region0: #{tpu_custom_call.1}
  #allocation0 [shape = 'u32[]', space=smem, size = 0x4, offset = 0x4, fixed_abs, tag = 'smem constant byte address 0x4 - core index']
  #allocation1 [shape = 'u32[72,128]{1,0:T(1,128)}', space=vmem, size = 0x9000, scoped, tag = 'internal scratch']
  %s0 = inlined_call_operand.hbm [shape: f32[3], index: 0, kind: input, shape index: {}]
  %s1 = inlined_call_operand.hbm [shape: f32[1,32], index: 1, kind: input, shape index: {}]
  %s2 = inlined_call_operand.hbm [shape: f32[16,32], index: 2, kind: output, shape index: {0}]
  %s3 = inlined_call_operand.hbm [shape: f32[16,32], index: 3, kind: output, shape index: {1}]
  %s4 = inlined_call_operand.hbm [shape: f32[16,32], index: 4, kind: output, shape index: {2}]
  %5 = xla_tuple %s2, %s3, %s4
  %s6 = sld [smem:[#allocation0]]
  $region42: #{tpu_custom_call.1} parent=0
    _
  %s8 = ssub.s32 1, %s6
  %s9 = scalar_select 0, %s8, %s6
  $region1: #{tpu_custom_call.1} parent=0
    #allocation2 [shape = 'u8[512]{0}', space=smem, size = 0x200, scoped, tag = 'input window, operand 0, single buffered']
    #allocation3 [shape = 's32[1]{0}', space=sflag, size = 0x4, scoped, tag = 'scoped memory for tpu_custom_call.1']
    #allocation4 [shape = 's32[1]{0}', space=sflag, size = 0x4, scoped, tag = 'scoped memory for tpu_custom_call.1']
    #allocation5 [shape = 's32[1]{0}', space=sflag, size = 0x4, scoped, tag = 'scoped memory for tpu_custom_call.1']
    #allocation6 [shape = 'u8[512]{0}', space=vmem, size = 0x400, scoped, tag = 'input window, operand 1, single buffered']
    #allocation7 [shape = 'u8[8192]{0}', space=vmem, size = 0x2000, scoped, tag = 'output window, operand 0, single buffered']
    #allocation8 [shape = 'u8[8192]{0}', space=vmem, size = 0x2000, scoped, tag = 'output window, operand 1, single buffered']
    #allocation9 [shape = 's32[1]{0}', space=sflag, size = 0x4, scoped, tag = 'scoped memory for tpu_custom_call.1']
    #allocation10 [shape = 'u8[8192]{0}', space=vmem, size = 0x2000, scoped, tag = 'output window, operand 2, single buffered']
    %10 = vsyncpa [#allocation5], 0
    %11 = vsyncpa [#allocation3], 0
    %12 = vsyncpa [#allocation4], 0
    %13 = vsyncpa [#allocation9], 0
    // Predicated region
    $region2: #{tpu_custom_call.1} parent=1 // pred_check
      _
    $region3: #{tpu_custom_call.1} parent=1 // pred_check_branch
      %15 = sbr.rel (0) target = $region5
    $region4: #{tpu_custom_call.1} parent=1 // pred_region
      %17 = vsyncadd [#allocation5], 0
      %s19 = sshll.u32 %s0, 4
      %s20 = int_to_ptr.hbm [resolvable:$true] %s19
      %22 = dma.hbm_to_smem %s20, 16, [#allocation2], [#allocation5]
    $region5: #{tpu_custom_call.1} parent=1 // pred_fallthru
      _
    // Predicated region
    $region6: #{tpu_custom_call.1} parent=1 // pred_check
      _
    $region7: #{tpu_custom_call.1} parent=1 // pred_check_branch
      %24 = sbr.rel (0) target = $region9
    $region8: #{tpu_custom_call.1} parent=1 // pred_region
      %26 = vsyncadd [#allocation3], 0
      %s28 = sshll.u32 %s1, 4
      %s29 = int_to_ptr.hbm [resolvable:$true] %s28
      %s30 = sshll.u32 [#allocation6], 4
      %s31 = int_to_ptr.vmem [resolvable:$true] %s30
      %33 = dma.hbm_to_vmem [thread:$0]  %s29, 16, %s31, [#allocation3]
    $region9: #{tpu_custom_call.1} parent=1 // pred_fallthru
      _
    // Predicated region
    $region10: #{tpu_custom_call.1} parent=1 // pred_check
      _
    $region11: #{tpu_custom_call.1} parent=1 // pred_check_branch
      %35 = sbr.rel (0) target = $region13
    $region12: #{tpu_custom_call.1} parent=1 // pred_region
      %37 = dma.done [#allocation5], 16
    $region13: #{tpu_custom_call.1} parent=1 // pred_fallthru
      _
    // Predicated region
    $region14: #{tpu_custom_call.1} parent=1 // pred_check
      _
    $region15: #{tpu_custom_call.1} parent=1 // pred_check_branch
      %39 = sbr.rel (0) target = $region17
    $region16: #{tpu_custom_call.1} parent=1 // pred_region
      %41 = dma.done [#allocation3], 16
    $region17: #{tpu_custom_call.1} parent=1 // pred_fallthru
      _
    %42 = sfence
    %s43 = sld [smem:[#allocation2]]
    %s44 = sld [smem:[#allocation2 + $0x1]]
    %s45 = sld [smem:[#allocation2 + $0x2]]
    %s46 = smul.u32 0, 16
    %v47 = vlaneseq
    %v48 = vshrl.u32 %v47, 7
    %v49 = vadd.s32 %v48, 8
    %v50 = vstv %s46
    %v51 = vadd.s32 %v50, %v48
    %v52 = vadd.s32 %v50, %v49
    %v53 = vcvt.s32.f32 %v51
    %v54 = vcvt.s32.f32 %v52
    %v55 = vstv %s43
    %v56 = vadd.f32 %v53, %v55
    %v57 = vadd.f32 %v54, %v55
    %v58 = vstv %s44
    %v59 = vrcp.pop %v58
    %v60 = vmul.f32 %v58, %v59
    %v61 = vsub.f32 1.0, %v60
    %v62 = vmul.f32 %v59, %v61
    %v63 = vadd.f32 %v59, %v62
    %vm64 = vweird.f32 %v58
    %vm65 = vweird.f32 %v59
    %vm66 = vmor %vm64, %vm65
    %v67 = vsel %vm66, %v59, %v63
    %v68 = vand.u32 2147483647, %v58
    %vm69 = vcmp.eq.f32.partialorder %v68, 8.507059e+37
    %v70 = vand.u32 %v58, 2147483648
    %v71 = vor.u32 1.1754944e-38, %v70
    %v72 = vsel %vm69, %v71, %v67
    %v73 = vmul.f32 %v56, %v72
    %v74 = vmul.f32 %v57, %v72
    %v75 = vld [vmem:[#allocation6] sm:$0x1]
    %v77 = vperm.slane %v75, 0
    %v79 = vmul.f32 %v73, %v77
    %v80 = vmul.f32 %v74, %v77
    %vm81 = vcmask 261120
    %82 = vst.msk [vmem:[#allocation7] sm:$0xff] %vm81, %v79
    %83 = vst.msk [vmem:[#allocation7 + $0x8] sm:$0xff] %vm81, %v80
    %v84 = vand.u32 2147483647, %v79
    %vm85 = vcmp.le.f32.partialorder %v84, 0.7853982
    %vm86 = vcmp.lt.s32.totalorder %v79, 0
    %v87 = vand.u32 %v79, 2139095040
    %v88 = vshrl.u32 %v87, 23
    %v89 = vsub.s32 %v88, 127
    %v90 = vand.u32 2147483647, %v79
    %v91 = vand.u32 %v90, 8388607
    %v92 = vor.u32 %v91, 8388608
    %v93 = vsub.s32 0, %v92
    %v94 = vadd.s32 %v89, 1
    %vm95 = vcmp.gt.s32.totalorder %v94, 0
    %v96 = vsel %vm95, %v94, 0
    %v97 = vshrl.u32 %v96, 5
    %v98 = vand.u32 %v96, 31
    %v99 = vsub.s32 32, %v98
    %v100 = vshrl.u32 683565275, %v99
    %v101 = vshll.u32 683565275, %v98
    %v102 = vshrl.u32 2475754826, %v99
    %v103 = vor.u32 %v101, %v102
    %v104 = vshll.u32 2475754826, %v98
    %v105 = vshrl.u32 2131351028, %v99
    %v106 = vor.u32 %v104, %v105
    %v107 = vshll.u32 2131351028, %v98
    %v108 = vshrl.u32 2102212464, %v99
    %v109 = vor.u32 %v107, %v108
    %v110 = vshll.u32 2102212464, %v98
    %v111 = vshrl.u32 920167782, %v99
    %v112 = vor.u32 %v110, %v111
    %v113 = vshll.u32 920167782, %v98
    %v114 = vshrl.u32 1326507024, %v99
    %v115 = vor.u32 %v113, %v114
    %vm116 = vcmp.lt.s32.totalorder %v97, 1
    %vm117 = vcmp.lt.s32.totalorder %v97, 2
    %vm118 = vcmp.lt.s32.totalorder %v97, 3
    %vm119 = vcmp.lt.s32.totalorder %v97, 4
    %v120 = vsel %vm116, %v100, %v103
    %v121 = vsel %vm119, %v109, 2102212464
    %v122 = vsel %vm118, %v106, %v121
    %v123 = vsel %vm117, %v120, %v122
    %v124 = vsel %vm116, %v103, %v106
    %v125 = vsel %vm119, %v112, 920167782
    %v126 = vsel %vm118, %v109, %v125
    %v127 = vsel %vm117, %v124, %v126
    %v128 = vsel %vm116, %v106, %v109
    %v129 = vsel %vm119, %v115, 1326507024
    %v130 = vsel %vm118, %v112, %v129
    %v131 = vsel %vm117, %v128, %v130
    %v132 = vshll.u32 %v92, 8
    %v133 = vand.u32 %v132, 65535
    %v134 = vshrl.u32 %v132, 16
    %v135 = vand.u32 %v131, 65535
    %v136 = vshrl.u32 %v131, 16
    %v137 = vmul.u32 %v133, %v135
    %v138 = vmul.u32 %v133, %v136
    %v139 = vmul.u32 %v134, %v135
    %v140 = vmul.u32 %v134, %v136
    %v141 = vshll.u32 %v138, 16
    %v142 = vshrl.u32 %v138, 16
    %v143 = vshll.u32 %v139, 16
    %v144 = vshrl.u32 %v139, 16
    %vm145 = vc.u32 %v137, %v141
    %v146 = vsel %vm145, 1, 0
    %v147 = vadd.s32 %v137, %v141
    %v148 = vadd.s32 %v140, %v146
    %vm149 = vc.u32 %v147, %v143
    %v150 = vsel %vm149, 1, 0
    %v151 = vadd.s32 %v147, %v143
    %v152 = vadd.s32 %v148, %v150
    %v153 = vadd.s32 %v152, %v142
    %v154 = vadd.s32 %v153, %v144
    %v155 = vand.u32 %v132, 65535
    %v156 = vshrl.u32 %v132, 16
    %v157 = vand.u32 %v127, 65535
    %v158 = vshrl.u32 %v127, 16
    %v159 = vmul.u32 %v155, %v157
    %v160 = vmul.u32 %v155, %v158
    %v161 = vmul.u32 %v156, %v157
    %v162 = vmul.u32 %v156, %v158
    %v163 = vshll.u32 %v160, 16
    %v164 = vshrl.u32 %v160, 16
    %v165 = vshll.u32 %v161, 16
    %v166 = vshrl.u32 %v161, 16
    %vm167 = vc.u32 %v159, %v163
    %v168 = vsel %vm167, 1, 0
    %v169 = vadd.s32 %v159, %v163
    %v170 = vadd.s32 %v162, %v168
    %vm171 = vc.u32 %v169, %v165
    %v172 = vsel %vm171, 1, 0
    %v173 = vadd.s32 %v169, %v165
    %v174 = vadd.s32 %v170, %v172
    %v175 = vadd.s32 %v174, %v164
    %v176 = vadd.s32 %v175, %v166
    %v177 = vmul.u32 %v132, %v123
    %v178 = vadd.s32 %v154, %v173
    %vm179 = vc.u32 %v154, %v173
    %v180 = vadd.s32 %v176, 1
    %v181 = vsel %vm179, %v180, %v176
    %v182 = vadd.s32 %v177, %v181
    %v183 = vadd.s32 %v182, 536870912
    %v184 = vshrl.u32 %v183, 30
    %v185 = vshll.u32 %v184, 30
    %v186 = vsub.s32 %v182, %v185
    %vm187 = vcmp.lt.s32.totalorder %v186, 0
    %v188 = vsub.s32 0, %v186
    %v189 = vsel %vm187, %v188, %v186
    %v190 = vclz %v189
    %v191 = vsub.s32 %v190, 2
    %vm192 = vcmp.gt.s32.totalorder 0, %v191
    %v193 = vsel %vm192, 0, %v191
    %v194 = vsub.s32 32, %v193
    %v195 = vshll.u32 %v186, %v193
    %v196 = vshrl.u32 %v178, %v194
    %v197 = vor.u32 %v195, %v196
    %v198 = vsub.s32 4294967266, %v193
    %v199 = vadd.s32 %v198, 127
    %v200 = vshll.u32 %v199, 23
    %v201 = vor.u32 4788187, %v200
    %v202 = vand.u32 2147483647, %v201
    %v204 = vcvt.s32.f32 %v197
    %v205 = vmul.f32 %v204, %v202
    %v206 = vxor.u32 %v205, 2147483648
    %v207 = vsel %vm86, %v206, %v205
    %v208 = vsub.s32 4, %v184
    %v209 = vsel %vm86, %v208, %v184
    %v210 = vsel %vm85, %v79, %v207
    %v211 = vsel %vm85, 0, %v209
    %v212 = vmul.f32 %v210, %v210
    %v213 = vmul.f32 %v212, -0.001358992
    %v214 = vadd.f32 %v213, 0.041655596
    %v215 = vmul.f32 %v212, %v214
    %v216 = vadd.f32 %v215, -0.4999988
    %v217 = vmul.f32 %v212, %v216
    %v218 = vadd.f32 1.0, %v217
    %v219 = vmul.f32 %v210, %v210
    %v220 = vmul.f32 %v219, -0.00019511016
    %v221 = vadd.f32 %v220, 0.008332121
    %v222 = vmul.f32 %v219, %v221
    %v223 = vadd.f32 %v222, -0.16666654
    %v224 = vmul.f32 %v219, %v223
    %v225 = vadd.f32 %v224, 1.0
    %v226 = vmul.f32 %v225, %v210
    %vm227 = vweird.f32 %v79
    %v228 = vand.u32 %v211, 3
    %vm229 = vcmp.lt.s32.totalorder %v228, 2
    %vm230 = vcmp.eq.s32.totalorder %v228, 0
    %v231 = vxor.u32 %v226, 2147483648
    %v232 = vsel %vm230, %v218, %v231
    %vm233 = vcmp.eq.s32.totalorder %v228, 2
    %v234 = vxor.u32 %v218, 2147483648
    %v235 = vsel %vm233, %v234, %v226
    %v236 = vsel %vm229, %v232, %v235
    %v237 = vsel %vm227, nan, %v236
    %v238 = vand.u32 2147483647, %v80
    %vm239 = vcmp.le.f32.partialorder %v238, 0.7853982
    %vm240 = vcmp.lt.s32.totalorder %v80, 0
    %v241 = vand.u32 %v80, 2139095040
    %v242 = vshrl.u32 %v241, 23
    %v243 = vsub.s32 %v242, 127
    %v244 = vand.u32 2147483647, %v80
    %v245 = vand.u32 %v244, 8388607
    %v246 = vor.u32 %v245, 8388608
    %v247 = vsub.s32 0, %v246
    %v248 = vadd.s32 %v243, 1
    %vm249 = vcmp.gt.s32.totalorder %v248, 0
    %v250 = vsel %vm249, %v248, 0
    %v251 = vshrl.u32 %v250, 5
    %v252 = vand.u32 %v250, 31
    %v253 = vsub.s32 32, %v252
    %v254 = vshrl.u32 683565275, %v253
    %v255 = vshll.u32 683565275, %v252
    %v256 = vshrl.u32 2475754826, %v253
    %v257 = vor.u32 %v255, %v256
    %v258 = vshll.u32 2475754826, %v252
    %v259 = vshrl.u32 2131351028, %v253
    %v260 = vor.u32 %v258, %v259
    %v261 = vshll.u32 2131351028, %v252
    %v262 = vshrl.u32 2102212464, %v253
    %v263 = vor.u32 %v261, %v262
    %v264 = vshll.u32 2102212464, %v252
    %v265 = vshrl.u32 920167782, %v253
    %v266 = vor.u32 %v264, %v265
    %v267 = vshll.u32 920167782, %v252
    %v268 = vshrl.u32 1326507024, %v253
    %v269 = vor.u32 %v267, %v268
    %vm270 = vcmp.lt.s32.totalorder %v251, 1
    %vm271 = vcmp.lt.s32.totalorder %v251, 2
    %vm272 = vcmp.lt.s32.totalorder %v251, 3
    %vm273 = vcmp.lt.s32.totalorder %v251, 4
    %v274 = vsel %vm270, %v254, %v257
    %v275 = vsel %vm273, %v263, 2102212464
    %v276 = vsel %vm272, %v260, %v275
    %v277 = vsel %vm271, %v274, %v276
    %v278 = vsel %vm270, %v257, %v260
    %v279 = vsel %vm273, %v266, 920167782
    %v280 = vsel %vm272, %v263, %v279
    %v281 = vsel %vm271, %v278, %v280
    %v282 = vsel %vm270, %v260, %v263
    %v283 = vsel %vm273, %v269, 1326507024
    %v284 = vsel %vm272, %v266, %v283
    %v285 = vsel %vm271, %v282, %v284
    %v286 = vshll.u32 %v246, 8
    %v287 = vand.u32 %v286, 65535
    %v288 = vshrl.u32 %v286, 16
    %v289 = vand.u32 %v285, 65535
    %v290 = vshrl.u32 %v285, 16
    %v291 = vmul.u32 %v287, %v289
    %v292 = vmul.u32 %v287, %v290
    %v293 = vmul.u32 %v288, %v289
    %v294 = vmul.u32 %v288, %v290
    %v295 = vshll.u32 %v292, 16
    %v296 = vshrl.u32 %v292, 16
    %v297 = vshll.u32 %v293, 16
    %v298 = vshrl.u32 %v293, 16
    %vm299 = vc.u32 %v291, %v295
    %v300 = vsel %vm299, 1, 0
    %v301 = vadd.s32 %v291, %v295
    %v302 = vadd.s32 %v294, %v300
    %vm303 = vc.u32 %v301, %v297
    %v304 = vsel %vm303, 1, 0
    %v305 = vadd.s32 %v301, %v297
    %v306 = vadd.s32 %v302, %v304
    %v307 = vadd.s32 %v306, %v296
    %v308 = vadd.s32 %v307, %v298
    %v309 = vand.u32 %v286, 65535
    %v310 = vshrl.u32 %v286, 16
    %v311 = vand.u32 %v281, 65535
    %v312 = vshrl.u32 %v281, 16
    %v313 = vmul.u32 %v309, %v311
    %v314 = vmul.u32 %v309, %v312
    %v315 = vmul.u32 %v310, %v311
    %v316 = vmul.u32 %v310, %v312
    %v317 = vshll.u32 %v314, 16
    %v318 = vshrl.u32 %v314, 16
    %v319 = vshll.u32 %v315, 16
    %v320 = vshrl.u32 %v315, 16
    %vm321 = vc.u32 %v313, %v317
    %v322 = vsel %vm321, 1, 0
    %v323 = vadd.s32 %v313, %v317
    %v324 = vadd.s32 %v316, %v322
    %vm325 = vc.u32 %v323, %v319
    %v326 = vsel %vm325, 1, 0
    %v327 = vadd.s32 %v323, %v319
    %v328 = vadd.s32 %v324, %v326
    %v329 = vadd.s32 %v328, %v318
    %v330 = vadd.s32 %v329, %v320
    %v331 = vmul.u32 %v286, %v277
    %v332 = vadd.s32 %v308, %v327
    %vm333 = vc.u32 %v308, %v327
    %v334 = vadd.s32 %v330, 1
    %v335 = vsel %vm333, %v334, %v330
    %v336 = vadd.s32 %v331, %v335
    %v337 = vadd.s32 %v336, 536870912
    %v338 = vshrl.u32 %v337, 30
    %v339 = vshll.u32 %v338, 30
    %v340 = vsub.s32 %v336, %v339
    %vm341 = vcmp.lt.s32.totalorder %v340, 0
    %v342 = vsub.s32 0, %v340
    %v343 = vsel %vm341, %v342, %v340
    %v344 = vclz %v343
    %v345 = vsub.s32 %v344, 2
    %vm346 = vcmp.gt.s32.totalorder 0, %v345
    %v347 = vsel %vm346, 0, %v345
    %v348 = vsub.s32 32, %v347
    %v349 = vshll.u32 %v340, %v347
    %v350 = vshrl.u32 %v332, %v348
    %v351 = vor.u32 %v349, %v350
    %v352 = vsub.s32 4294967266, %v347
    %v353 = vadd.s32 %v352, 127
    %v354 = vshll.u32 %v353, 23
    %v355 = vor.u32 4788187, %v354
    %v356 = vand.u32 2147483647, %v355
    %v358 = vcvt.s32.f32 %v351
    %v359 = vmul.f32 %v358, %v356
    %v360 = vxor.u32 %v359, 2147483648
    %v361 = vsel %vm240, %v360, %v359
    %v362 = vsub.s32 4, %v338
    %v363 = vsel %vm240, %v362, %v338
    %v364 = vsel %vm239, %v80, %v361
    %v365 = vsel %vm239, 0, %v363
    %v366 = vmul.f32 %v364, %v364
    %v367 = vmul.f32 %v366, -0.001358992
    %v368 = vadd.f32 %v367, 0.041655596
    %v369 = vmul.f32 %v366, %v368
    %v370 = vadd.f32 %v369, -0.4999988
    %v371 = vmul.f32 %v366, %v370
    %v372 = vadd.f32 1.0, %v371
    %v373 = vmul.f32 %v364, %v364
    %v374 = vmul.f32 %v373, -0.00019511016
    %v375 = vadd.f32 %v374, 0.008332121
    %v376 = vmul.f32 %v373, %v375
    %v377 = vadd.f32 %v376, -0.16666654
    %v378 = vmul.f32 %v373, %v377
    %v379 = vadd.f32 %v378, 1.0
    %v380 = vmul.f32 %v379, %v364
    %vm381 = vweird.f32 %v80
    %v382 = vand.u32 %v365, 3
    %vm383 = vcmp.lt.s32.totalorder %v382, 2
    %vm384 = vcmp.eq.s32.totalorder %v382, 0
    %v385 = vxor.u32 %v380, 2147483648
    %v386 = vsel %vm384, %v372, %v385
    %vm387 = vcmp.eq.s32.totalorder %v382, 2
    %v388 = vxor.u32 %v372, 2147483648
    %v389 = vsel %vm387, %v388, %v380
    %v390 = vsel %vm383, %v386, %v389
    %v391 = vsel %vm381, nan, %v390
    %v392 = vstv %s45
    %v393 = vmul.f32 %v237, %v392
    %v394 = vmul.f32 %v391, %v392
    %v395 = vand.u32 2147483647, %v79
    %vm396 = vcmp.le.f32.partialorder %v395, 0.7853982
    %vm397 = vcmp.lt.s32.totalorder %v79, 0
    %v398 = vand.u32 %v79, 2139095040
    %v399 = vshrl.u32 %v398, 23
    %v400 = vsub.s32 %v399, 127
    %v401 = vand.u32 2147483647, %v79
    %v402 = vand.u32 %v401, 8388607
    %v403 = vor.u32 %v402, 8388608
    %v404 = vsub.s32 0, %v403
    %v405 = vadd.s32 %v400, 1
    %vm406 = vcmp.gt.s32.totalorder %v405, 0
    %v407 = vsel %vm406, %v405, 0
    %v408 = vshrl.u32 %v407, 5
    %v409 = vand.u32 %v407, 31
    %v410 = vsub.s32 32, %v409
    %v411 = vshrl.u32 683565275, %v410
    %v412 = vshll.u32 683565275, %v409
    %v413 = vshrl.u32 2475754826, %v410
    %v414 = vor.u32 %v412, %v413
    %v415 = vshll.u32 2475754826, %v409
    %v416 = vshrl.u32 2131351028, %v410
    %v417 = vor.u32 %v415, %v416
    %v418 = vshll.u32 2131351028, %v409
    %v419 = vshrl.u32 2102212464, %v410
    %v420 = vor.u32 %v418, %v419
    %v421 = vshll.u32 2102212464, %v409
    %v422 = vshrl.u32 920167782, %v410
    %v423 = vor.u32 %v421, %v422
    %v424 = vshll.u32 920167782, %v409
    %v425 = vshrl.u32 1326507024, %v410
    %v426 = vor.u32 %v424, %v425
    %vm427 = vcmp.lt.s32.totalorder %v408, 1
    %vm428 = vcmp.lt.s32.totalorder %v408, 2
    %vm429 = vcmp.lt.s32.totalorder %v408, 3
    %vm430 = vcmp.lt.s32.totalorder %v408, 4
    %v431 = vsel %vm427, %v411, %v414
    %v432 = vsel %vm430, %v420, 2102212464
    %v433 = vsel %vm429, %v417, %v432
    %v434 = vsel %vm428, %v431, %v433
    %v435 = vsel %vm427, %v414, %v417
    %v436 = vsel %vm430, %v423, 920167782
    %v437 = vsel %vm429, %v420, %v436
    %v438 = vsel %vm428, %v435, %v437
    %v439 = vsel %vm427, %v417, %v420
    %v440 = vsel %vm430, %v426, 1326507024
    %v441 = vsel %vm429, %v423, %v440
    %v442 = vsel %vm428, %v439, %v441
    %v443 = vshll.u32 %v403, 8
    %v444 = vand.u32 %v443, 65535
    %v445 = vshrl.u32 %v443, 16
    %v446 = vand.u32 %v442, 65535
    %v447 = vshrl.u32 %v442, 16
    %v448 = vmul.u32 %v444, %v446
    %v449 = vmul.u32 %v444, %v447
    %v450 = vmul.u32 %v445, %v446
    %v451 = vmul.u32 %v445, %v447
    %v452 = vshll.u32 %v449, 16
    %v453 = vshrl.u32 %v449, 16
    %v454 = vshll.u32 %v450, 16
    %v455 = vshrl.u32 %v450, 16
    %vm456 = vc.u32 %v448, %v452
    %v457 = vsel %vm456, 1, 0
    %v458 = vadd.s32 %v448, %v452
    %v459 = vadd.s32 %v451, %v457
    %vm460 = vc.u32 %v458, %v454
    %v461 = vsel %vm460, 1, 0
    %v462 = vadd.s32 %v458, %v454
    %v463 = vadd.s32 %v459, %v461
    %v464 = vadd.s32 %v463, %v453
    %v465 = vadd.s32 %v464, %v455
    %v466 = vand.u32 %v443, 65535
    %v467 = vshrl.u32 %v443, 16
    %v468 = vand.u32 %v438, 65535
    %v469 = vshrl.u32 %v438, 16
    %v470 = vmul.u32 %v466, %v468
    %v471 = vmul.u32 %v466, %v469
    %v472 = vmul.u32 %v467, %v468
    %v473 = vmul.u32 %v467, %v469
    %v474 = vshll.u32 %v471, 16
    %v475 = vshrl.u32 %v471, 16
    %v476 = vshll.u32 %v472, 16
    %v477 = vshrl.u32 %v472, 16
    %vm478 = vc.u32 %v470, %v474
    %v479 = vsel %vm478, 1, 0
    %v480 = vadd.s32 %v470, %v474
    %v481 = vadd.s32 %v473, %v479
    %vm482 = vc.u32 %v480, %v476
    %v483 = vsel %vm482, 1, 0
    %v484 = vadd.s32 %v480, %v476
    %v485 = vadd.s32 %v481, %v483
    %v486 = vadd.s32 %v485, %v475
    %v487 = vadd.s32 %v486, %v477
    %v488 = vmul.u32 %v443, %v434
    %v489 = vadd.s32 %v465, %v484
    %vm490 = vc.u32 %v465, %v484
    %v491 = vadd.s32 %v487, 1
    %v492 = vsel %vm490, %v491, %v487
    %v493 = vadd.s32 %v488, %v492
    %v494 = vadd.s32 %v493, 536870912
    %v495 = vshrl.u32 %v494, 30
    %v496 = vshll.u32 %v495, 30
    %v497 = vsub.s32 %v493, %v496
    %vm498 = vcmp.lt.s32.totalorder %v497, 0
    %v499 = vsub.s32 0, %v497
    %v500 = vsel %vm498, %v499, %v497
    %v501 = vclz %v500
    %v502 = vsub.s32 %v501, 2
    %vm503 = vcmp.gt.s32.totalorder 0, %v502
    %v504 = vsel %vm503, 0, %v502
    %v505 = vsub.s32 32, %v504
    %v506 = vshll.u32 %v497, %v504
    %v507 = vshrl.u32 %v489, %v505
    %v508 = vor.u32 %v506, %v507
    %v509 = vsub.s32 4294967266, %v504
    %v510 = vadd.s32 %v509, 127
    %v511 = vshll.u32 %v510, 23
    %v512 = vor.u32 4788187, %v511
    %v513 = vand.u32 2147483647, %v512
    %v515 = vcvt.s32.f32 %v508
    %v516 = vmul.f32 %v515, %v513
    %v517 = vxor.u32 %v516, 2147483648
    %v518 = vsel %vm397, %v517, %v516
    %v519 = vsub.s32 4, %v495
    %v520 = vsel %vm397, %v519, %v495
    %v521 = vsel %vm396, %v79, %v518
    %v522 = vsel %vm396, 0, %v520
    %v523 = vmul.f32 %v521, %v521
    %v524 = vmul.f32 %v523, -0.001358992
    %v525 = vadd.f32 %v524, 0.041655596
    %v526 = vmul.f32 %v523, %v525
    %v527 = vadd.f32 %v526, -0.4999988
    %v528 = vmul.f32 %v523, %v527
    %v529 = vadd.f32 1.0, %v528
    %v530 = vmul.f32 %v521, %v521
    %v531 = vmul.f32 %v530, -0.00019511016
    %v532 = vadd.f32 %v531, 0.008332121
    %v533 = vmul.f32 %v530, %v532
    %v534 = vadd.f32 %v533, -0.16666654
    %v535 = vmul.f32 %v530, %v534
    %v536 = vadd.f32 %v535, 1.0
    %v537 = vmul.f32 %v536, %v521
    %vm538 = vweird.f32 %v79
    %v539 = vadd.s32 %v522, 3
    %v540 = vand.u32 %v539, 3
    %vm541 = vcmp.lt.s32.totalorder %v540, 2
    %vm542 = vcmp.eq.s32.totalorder %v540, 0
    %v543 = vxor.u32 %v537, 2147483648
    %v544 = vsel %vm542, %v529, %v543
    %vm545 = vcmp.eq.s32.totalorder %v540, 2
    %v546 = vxor.u32 %v529, 2147483648
    %v547 = vsel %vm545, %v546, %v537
    %v548 = vsel %vm541, %v544, %v547
    %v549 = vsel %vm538, nan, %v548
    %v550 = vand.u32 2147483647, %v80
    %vm551 = vcmp.le.f32.partialorder %v550, 0.7853982
    %vm552 = vcmp.lt.s32.totalorder %v80, 0
    %v553 = vand.u32 %v80, 2139095040
    %v554 = vshrl.u32 %v553, 23
    %v555 = vsub.s32 %v554, 127
    %v556 = vand.u32 2147483647, %v80
    %v557 = vand.u32 %v556, 8388607
    %v558 = vor.u32 %v557, 8388608
    %v559 = vsub.s32 0, %v558
    %v560 = vadd.s32 %v555, 1
    %vm561 = vcmp.gt.s32.totalorder %v560, 0
    %v562 = vsel %vm561, %v560, 0
    %v563 = vshrl.u32 %v562, 5
    %v564 = vand.u32 %v562, 31
    %v565 = vsub.s32 32, %v564
    %v566 = vshrl.u32 683565275, %v565
    %v567 = vshll.u32 683565275, %v564
    %v568 = vshrl.u32 2475754826, %v565
    %v569 = vor.u32 %v567, %v568
    %v570 = vshll.u32 2475754826, %v564
    %v571 = vshrl.u32 2131351028, %v565
    %v572 = vor.u32 %v570, %v571
    %v573 = vshll.u32 2131351028, %v564
    %v574 = vshrl.u32 2102212464, %v565
    %v575 = vor.u32 %v573, %v574
    %v576 = vshll.u32 2102212464, %v564
    %v577 = vshrl.u32 920167782, %v565
    %v578 = vor.u32 %v576, %v577
    %v579 = vshll.u32 920167782, %v564
    %v580 = vshrl.u32 1326507024, %v565
    %v581 = vor.u32 %v579, %v580
    %vm582 = vcmp.lt.s32.totalorder %v563, 1
    %vm583 = vcmp.lt.s32.totalorder %v563, 2
    %vm584 = vcmp.lt.s32.totalorder %v563, 3
    %vm585 = vcmp.lt.s32.totalorder %v563, 4
    %v586 = vsel %vm582, %v566, %v569
    %v587 = vsel %vm585, %v575, 2102212464
    %v588 = vsel %vm584, %v572, %v587
    %v589 = vsel %vm583, %v586, %v588
    %v590 = vsel %vm582, %v569, %v572
    %v591 = vsel %vm585, %v578, 920167782
    %v592 = vsel %vm584, %v575, %v591
    %v593 = vsel %vm583, %v590, %v592
    %v594 = vsel %vm582, %v572, %v575
    %v595 = vsel %vm585, %v581, 1326507024
    %v596 = vsel %vm584, %v578, %v595
    %v597 = vsel %vm583, %v594, %v596
    %v598 = vshll.u32 %v558, 8
    %v599 = vand.u32 %v598, 65535
    %v600 = vshrl.u32 %v598, 16
    %v601 = vand.u32 %v597, 65535
    %v602 = vshrl.u32 %v597, 16
    %v603 = vmul.u32 %v599, %v601
    %v604 = vmul.u32 %v599, %v602
    %v605 = vmul.u32 %v600, %v601
    %v606 = vmul.u32 %v600, %v602
    %v607 = vshll.u32 %v604, 16
    %v608 = vshrl.u32 %v604, 16
    %v609 = vshll.u32 %v605, 16
    %v610 = vshrl.u32 %v605, 16
    %vm611 = vc.u32 %v603, %v607
    %v612 = vsel %vm611, 1, 0
    %v613 = vadd.s32 %v603, %v607
    %v614 = vadd.s32 %v606, %v612
    %vm615 = vc.u32 %v613, %v609
    %v616 = vsel %vm615, 1, 0
    %v617 = vadd.s32 %v613, %v609
    %v618 = vadd.s32 %v614, %v616
    %v619 = vadd.s32 %v618, %v608
    %v620 = vadd.s32 %v619, %v610
    %v621 = vand.u32 %v598, 65535
    %v622 = vshrl.u32 %v598, 16
    %v623 = vand.u32 %v593, 65535
    %v624 = vshrl.u32 %v593, 16
    %v625 = vmul.u32 %v621, %v623
    %v626 = vmul.u32 %v621, %v624
    %v627 = vmul.u32 %v622, %v623
    %v628 = vmul.u32 %v622, %v624
    %v629 = vshll.u32 %v626, 16
    %v630 = vshrl.u32 %v626, 16
    %v631 = vshll.u32 %v627, 16
    %v632 = vshrl.u32 %v627, 16
    %vm633 = vc.u32 %v625, %v629
    %v634 = vsel %vm633, 1, 0
    %v635 = vadd.s32 %v625, %v629
    %v636 = vadd.s32 %v628, %v634
    %vm637 = vc.u32 %v635, %v631
    %v638 = vsel %vm637, 1, 0
    %v639 = vadd.s32 %v635, %v631
    %v640 = vadd.s32 %v636, %v638
    %v641 = vadd.s32 %v640, %v630
    %v642 = vadd.s32 %v641, %v632
    %v643 = vmul.u32 %v598, %v589
    %v644 = vadd.s32 %v620, %v639
    %vm645 = vc.u32 %v620, %v639
    %v646 = vadd.s32 %v642, 1
    %v647 = vsel %vm645, %v646, %v642
    %v648 = vadd.s32 %v643, %v647
    %v649 = vadd.s32 %v648, 536870912
    %v650 = vshrl.u32 %v649, 30
    %v651 = vshll.u32 %v650, 30
    %v652 = vsub.s32 %v648, %v651
    %vm653 = vcmp.lt.s32.totalorder %v652, 0
    %v654 = vsub.s32 0, %v652
    %v655 = vsel %vm653, %v654, %v652
    %v656 = vclz %v655
    %v657 = vsub.s32 %v656, 2
    %vm658 = vcmp.gt.s32.totalorder 0, %v657
    %v659 = vsel %vm658, 0, %v657
    %v660 = vsub.s32 32, %v659
    %v661 = vshll.u32 %v652, %v659
    %v662 = vshrl.u32 %v644, %v660
    %v663 = vor.u32 %v661, %v662
    %v664 = vsub.s32 4294967266, %v659
    %v665 = vadd.s32 %v664, 127
    %v666 = vshll.u32 %v665, 23
    %v667 = vor.u32 4788187, %v666
    %v668 = vand.u32 2147483647, %v667
    %v670 = vcvt.s32.f32 %v663
    %v671 = vmul.f32 %v670, %v668
    %v672 = vxor.u32 %v671, 2147483648
    %v673 = vsel %vm552, %v672, %v671
    %v674 = vsub.s32 4, %v650
    %v675 = vsel %vm552, %v674, %v650
    %v676 = vsel %vm551, %v80, %v673
    %v677 = vsel %vm551, 0, %v675
    %v678 = vmul.f32 %v676, %v676
    %v679 = vmul.f32 %v678, -0.001358992
    %v680 = vadd.f32 %v679, 0.041655596
    %v681 = vmul.f32 %v678, %v680
    %v682 = vadd.f32 %v681, -0.4999988
    %v683 = vmul.f32 %v678, %v682
    %v684 = vadd.f32 1.0, %v683
    %v685 = vmul.f32 %v676, %v676
    %v686 = vmul.f32 %v685, -0.00019511016
    %v687 = vadd.f32 %v686, 0.008332121
    %v688 = vmul.f32 %v685, %v687
    %v689 = vadd.f32 %v688, -0.16666654
    %v690 = vmul.f32 %v685, %v689
    %v691 = vadd.f32 %v690, 1.0
    %v692 = vmul.f32 %v691, %v676
    %vm693 = vweird.f32 %v80
    %v694 = vadd.s32 %v677, 3
    %v695 = vand.u32 %v694, 3
    %vm696 = vcmp.lt.s32.totalorder %v695, 2
    %vm697 = vcmp.eq.s32.totalorder %v695, 0
    %v698 = vxor.u32 %v692, 2147483648
    %v699 = vsel %vm697, %v684, %v698
    %vm700 = vcmp.eq.s32.totalorder %v695, 2
    %v701 = vxor.u32 %v684, 2147483648
    %v702 = vsel %vm700, %v701, %v692
    %v703 = vsel %vm696, %v699, %v702
    %v704 = vsel %vm693, nan, %v703
    %v705 = vmul.f32 %v549, %v392
    %v706 = vmul.f32 %v704, %v392
    %v707 = vlaneseq
    %v708 = vand.u32 %v707, 127
    %vm709 = vcmp.lt.s32.totalorder %v708, 0
    %v710 = vsub.s32 0, %v708
    %v711 = vsel %vm709, %v710, %v708
    %v712 = vshrl.u32 %v711, 1
    %v713 = vand.u32 %v711, 1
    %v714 = vsub.s32 0, %v713
    %v715 = vsel %vm709, %v714, %v713
    %vm716 = vcmp.ne.s32.totalorder %v715, 0
    %vm717 = vcmp.lt.s32.totalorder %v715, 0
    %vm718 = vmand %vm717, %vm716
    %v719 = vadd.s32 %v715, 2
    %v720 = vsel %vm718, %v719, %v715
    %721 = vst.msk [vmem:[#allocation8] sm:$0xff] %vm81, %v393
    %722 = vst.msk [vmem:[#allocation8 + $0x8] sm:$0xff] %vm81, %v394
    %vm723 = vcmp.eq.s32.totalorder %v720, 0
    %v724 = vsub.f32 0.0, %v705
    %v725 = vsub.f32 0.0, %v706
    %v726 = vsel %vm723, %v724, %v705
    %v727 = vsel %vm723, %v725, %v706
    %728 = vst.msk [vmem:[#allocation10] sm:$0xff] %vm81, %v726
    %729 = vst.msk [vmem:[#allocation10 + $0x8] sm:$0xff] %vm81, %v727
    // Predicated region
    $region18: #{tpu_custom_call.1} parent=1 // pred_check
      _
    $region19: #{tpu_custom_call.1} parent=1 // pred_check_branch
      %731 = sbr.rel (0) target = $region21
    $region20: #{tpu_custom_call.1} parent=1 // pred_region
      %733 = vsyncadd [#allocation4], 0
      %s734 = sshll.u32 [#allocation7], 4
      %s735 = int_to_ptr.vmem [resolvable:$true] %s734
      %s736 = sshll.u32 %s2, 4
      %s737 = int_to_ptr.hbm [resolvable:$true] %s736
      %742 = dma.vmem_to_hbm [thread:$0]  %s735, 256, %s737, [#allocation4], 128, 128, 8
    $region21: #{tpu_custom_call.1} parent=1 // pred_fallthru
      _
    // Predicated region
    $region22: #{tpu_custom_call.1} parent=1 // pred_check
      _
    $region23: #{tpu_custom_call.1} parent=1 // pred_check_branch
      %744 = sbr.rel (0) target = $region25
    $region24: #{tpu_custom_call.1} parent=1 // pred_region
      %746 = vsyncadd [#allocation9], 0
      %s747 = sshll.u32 [#allocation8], 4
      %s748 = int_to_ptr.vmem [resolvable:$true] %s747
      %s749 = sshll.u32 %s3, 4
      %s750 = int_to_ptr.hbm [resolvable:$true] %s749
      %755 = dma.vmem_to_hbm [thread:$0]  %s748, 256, %s750, [#allocation9], 128, 128, 8
    $region25: #{tpu_custom_call.1} parent=1 // pred_fallthru
      _
    // Predicated region
    $region26: #{tpu_custom_call.1} parent=1 // pred_check
      _
    $region27: #{tpu_custom_call.1} parent=1 // pred_check_branch
      %757 = sbr.rel (0) target = $region29
    $region28: #{tpu_custom_call.1} parent=1 // pred_region
      %759 = vsyncadd [#allocation9], 0
      %s760 = sshll.u32 [#allocation10], 4
      %s761 = int_to_ptr.vmem [resolvable:$true] %s760
      %s762 = sshll.u32 %s4, 4
      %s763 = int_to_ptr.hbm [resolvable:$true] %s762
      %768 = dma.vmem_to_hbm [thread:$0]  %s761, 256, %s763, [#allocation9], 128, 128, 8
    $region29: #{tpu_custom_call.1} parent=1 // pred_fallthru
      _
    // Predicated region
    $region30: #{tpu_custom_call.1} parent=1 // pred_check
      _
    $region31: #{tpu_custom_call.1} parent=1 // pred_check_branch
      %770 = sbr.rel (0) target = $region33
    $region32: #{tpu_custom_call.1} parent=1 // pred_region
      %772 = dma.done [#allocation4], 256
    $region33: #{tpu_custom_call.1} parent=1 // pred_fallthru
      _
    // Predicated region
    $region34: #{tpu_custom_call.1} parent=1 // pred_check
      _
    $region35: #{tpu_custom_call.1} parent=1 // pred_check_branch
      %774 = sbr.rel (0) target = $region37
    $region36: #{tpu_custom_call.1} parent=1 // pred_region
      %776 = dma.done [#allocation9], 256
    $region37: #{tpu_custom_call.1} parent=1 // pred_fallthru
      _
    // Predicated region
    $region38: #{tpu_custom_call.1} parent=1 // pred_check
      _
    $region39: #{tpu_custom_call.1} parent=1 // pred_check_branch
      %778 = sbr.rel (0) target = $region41
    $region40: #{tpu_custom_call.1} parent=1 // pred_region
      %780 = dma.done [#allocation9], 256
    $region41: #{tpu_custom_call.1} parent=1 // pred_fallthru
      _
    %781 = vsyncpa [#allocation3], 1
    %782 = vsyncpa [#allocation4], 1
    %783 = vsyncpa [#allocation9], 1
    %784 = vsyncpa [#allocation5], 1

</llo_original>
